<compile_context>
chip_gen: v6e
topology: v6e:2x2x1
jax: 0.10.0
libtpu: 0.0.40
codegen_flags: <defaults>
</compile_context>

<pallas_src>
import functools

import jax
import jax.numpy as jnp
from jax.experimental import pallas as pl
from jax.experimental.pallas import tpu as pltpu


def _cacsnet_kernel(w_ref, x_ref, o_ref, *, C):
    # w_ref : (3,)    SMEM  Conv1d(1, 1, 3, padding=1, bias=False) weights
    # x_ref : (R, HW) VMEM  rows ordered (batch, plane, channel); R = 3*B*C
    # o_ref : (R, HW) VMEM  same row layout (== channel-concatenated output)
    x = x_ref[...]
    R = x.shape[0]

    # AdaptiveAvgPool2d(1): mean over the spatial (lane) axis.
    y = jnp.mean(x, axis=-1, keepdims=True)                        # (R, 1) f32

    # k=3 channel conv expressed as a shifted add along the row (sublane) axis.
    zero_row = jnp.zeros((1, 1), jnp.float32)
    y_prev = jnp.concatenate([zero_row, y[:-1, :]], axis=0)        # row r -> y[r-1]
    y_next = jnp.concatenate([y[1:, :], zero_row], axis=0)         # row r -> y[r+1]

    # Zero the taps at every C-row group boundary: each (batch, plane) group of
    # C consecutive rows is an independent channel axis for the conv.
    c_idx = jax.lax.broadcasted_iota(jnp.int32, (R, 1), 0) % C
    y_prev = jnp.where(c_idx == 0, 0.0, y_prev)
    y_next = jnp.where(c_idx == C - 1, 0.0, y_next)

    logit = w_ref[0] * y_prev + w_ref[1] * y + w_ref[2] * y_next   # (R, 1)
    s = jax.nn.sigmoid(logit)

    # x * y.expand_as(x): broadcast the per-channel gate over the spatial axis.
    o_ref[...] = (x * s).astype(o_ref.dtype)


def cacsnet_forward(x_r, x_g, x_b, conv_w):
    """x_r/x_g/x_b: (B, C, H, W) float32. conv_w: (3,) Conv1d weight (no bias)."""
    B, C, H, W = x_r.shape
    HW = H * W
    R = 3 * B * C

    # Stack planes so rows are ordered (batch, plane, channel): this matches the
    # channel layout of torch.cat((x_r, x_g, x_b), 1) and yields one dense tile.
    x_all = jnp.stack([x_r, x_g, x_b], axis=1).reshape(R, HW)
    conv_w = conv_w.astype(jnp.float32)

    out = pl.pallas_call(
        functools.partial(_cacsnet_kernel, C=C),
        out_shape=jax.ShapeDtypeStruct((R, HW), x_r.dtype),
        grid_spec=pltpu.PrefetchScalarGridSpec(
            num_scalar_prefetch=0,
            grid=(1,),
            in_specs=[
                pl.BlockSpec(memory_space=pltpu.MemorySpace.SMEM),   # conv_w (3,)
                pl.BlockSpec((R, HW), lambda i: (0, 0)),             # stacked planes
            ],
            out_specs=pl.BlockSpec((R, HW), lambda i: (0, 0)),
        ),
        compiler_params=pltpu.CompilerParams(
            dimension_semantics=("arbitrary",)),
    )(conv_w, x_all)

    # torch.cat((x_r, x_g, x_b), 1) in NCHW.
    return out.reshape(B, 3 * C, H, W)


def _eca_ref(x, w):
    # Pure-JAX reference of eca_layer.forward.
    y = x.mean(axis=(2, 3))                            # (B, C)
    yp = jnp.pad(y, ((0, 0), (1, 1)))
    yc = w[0] * yp[:, :-2] + w[1] * yp[:, 1:-1] + w[2] * yp[:, 2:]
    s = jax.nn.sigmoid(yc)
    return x * s[:, :, None, None]


if __name__ == "__main__":
    key = jax.random.PRNGKey(0)
    k1, k2, k3, kw = jax.random.split(key, 4)

    B, C, H, W = 2, 4, 16, 16
    x_r = jax.random.normal(k1, (B, C, H, W), dtype=jnp.float32)
    x_g = jax.random.normal(k2, (B, C, H, W), dtype=jnp.float32)
    x_b = jax.random.normal(k3, (B, C, H, W), dtype=jnp.float32)

    # Deterministic Conv1d(1, 1, 3, bias=False) weight (PyTorch-style uniform bound).
    bound = 1.0 / (3.0 ** 0.5)
    conv_w = jax.random.uniform(kw, (3,), minval=-bound, maxval=bound,
                                dtype=jnp.float32)

    out = cacsnet_forward(x_r, x_g, x_b, conv_w)
    out = jax.block_until_ready(out)

    # TODO(synk): the PyTorch forward only print()s and returns None; we return
    # the concatenated tensor it computes (torch.cat((x_r, x_g, x_b), 1)).
    ref = jnp.concatenate(
        [_eca_ref(x_r, conv_w), _eca_ref(x_g, conv_w), _eca_ref(x_b, conv_w)],
        axis=1,
    )
    assert out.shape == (B, 3 * C, H, W)
    assert jnp.allclose(out, ref, atol=1e-5, rtol=1e-5)

    print("KERNEL_OK")
</pallas_src>

<mosaic_0001>
module attributes {stable_mosaic.version = 11 : i64} {
  func.func @_cacsnet_kernel(%arg0: i32, %arg1: memref<3xf32, #tpu.memory_space<smem>>, %arg2: memref<24x256xf32, #tpu.memory_space<vmem>>, %arg3: memref<24x256xf32, #tpu.memory_space<vmem>>) attributes {dimension_semantics = [#tpu.dimension_semantics<arbitrary>], iteration_bounds = array<i64: 1>, scalar_prefetch = 0 : i64, scratch_operands = 0 : i64, tpu.core_type = #tpu.core_type<tc>, window_params = [{transform_indices = @transform_0, window_bounds = array<i64: 3>}, {pipeline_mode = #tpu.pipeline_mode<synchronous>, transform_indices = @transform_1, window_bounds = array<i64: 24, 256>}, {pipeline_mode = #tpu.pipeline_mode<synchronous>, transform_indices = @transform_2, window_bounds = array<i64: 24, 256>}]} {
    %c0 = arith.constant 0 : index
    %c0_0 = arith.constant 0 : index
    %0 = vector.load %arg2[%c0, %c0_0] : memref<24x256xf32, #tpu.memory_space<vmem>>, vector<24x256xf32>
    %cst = arith.constant dense<0.000000e+00> : vector<24xf32>
    %1 = vector.multi_reduction <add>, %0, %cst [1] : vector<24x256xf32> to vector<24xf32>
    %2 = vector.shape_cast %1 : vector<24xf32> to vector<24x1xf32>
    %cst_1 = arith.constant 2.560000e+02 : f32
    %3 = vector.broadcast %cst_1 : f32 to vector<24x1xf32>
    %4 = arith.divf %2, %3 : vector<24x1xf32>
    %cst_2 = arith.constant 0.000000e+00 : f32
    %5 = vector.broadcast %cst_2 : f32 to vector<1x1xf32>
    %6 = vector.extract_strided_slice %4 {offsets = [0, 0], sizes = [23, 1], strides = [1, 1]} : vector<24x1xf32> to vector<23x1xf32>
    %7 = tpu.concatenate %5, %6 in 0 : vector<1x1xf32>, vector<23x1xf32> -> vector<24x1xf32>
    %8 = vector.extract_strided_slice %4 {offsets = [1, 0], sizes = [23, 1], strides = [1, 1]} : vector<24x1xf32> to vector<23x1xf32>
    %9 = tpu.concatenate %8, %5 in 0 : vector<23x1xf32>, vector<1x1xf32> -> vector<24x1xf32>
    %10 = tpu.iota {dimensions = array<i32: 0>} : vector<24x1xi32>
    %c4_i32 = arith.constant 4 : i32
    %c0_i32 = arith.constant 0 : i32
    %11 = arith.cmpi eq, %c4_i32, %c0_i32 : i32
    %c1_i32 = arith.constant 1 : i32
    %12 = arith.select %11, %c1_i32, %c4_i32 : i32
    %13 = vector.broadcast %12 : i32 to vector<24x1xi32>
    %14 = arith.remsi %10, %13 : vector<24x1xi32>
    %c0_i32_3 = arith.constant 0 : i32
    %15 = vector.broadcast %c0_i32_3 : i32 to vector<24x1xi32>
    %16 = arith.cmpi ne, %14, %15 : vector<24x1xi32>
    %c0_i32_4 = arith.constant 0 : i32
    %17 = vector.broadcast %c0_i32_4 : i32 to vector<24x1xi32>
    %18 = arith.cmpi slt, %14, %17 : vector<24x1xi32>
    %c0_i32_5 = arith.constant 0 : i32
    %19 = arith.cmpi slt, %12, %c0_i32_5 : i32
    %20 = vector.broadcast %19 : i1 to vector<24x1xi1>
    %21 = vector.broadcast %20 : vector<24x1xi1> to vector<24x1xi1>
    %22 = arith.xori %18, %21 : vector<24x1xi1>
    %23 = arith.andi %22, %16 : vector<24x1xi1>
    %24 = vector.broadcast %12 : i32 to vector<24x1xi32>
    %25 = arith.addi %14, %24 : vector<24x1xi32>
    %26 = arith.select %23, %25, %14 : vector<24x1xi1>, vector<24x1xi32>
    %c0_i32_6 = arith.constant 0 : i32
    %27 = vector.broadcast %c0_i32_6 : i32 to vector<24x1xi32>
    %28 = arith.cmpi eq, %26, %27 : vector<24x1xi32>
    %cst_7 = arith.constant 0.000000e+00 : f32
    %29 = vector.broadcast %cst_7 : f32 to vector<24x1xf32>
    %30 = arith.select %28, %29, %7 : vector<24x1xi1>, vector<24x1xf32>
    %c3_i32 = arith.constant 3 : i32
    %31 = vector.broadcast %c3_i32 : i32 to vector<24x1xi32>
    %32 = arith.cmpi eq, %26, %31 : vector<24x1xi32>
    %cst_8 = arith.constant 0.000000e+00 : f32
    %33 = vector.broadcast %cst_8 : f32 to vector<24x1xf32>
    %34 = arith.select %32, %33, %9 : vector<24x1xi1>, vector<24x1xf32>
    %c0_9 = arith.constant 0 : index
    %35 = memref.load %arg1[%c0_9] : memref<3xf32, #tpu.memory_space<smem>>
    %36 = vector.broadcast %35 : f32 to vector<24x1xf32>
    %37 = arith.mulf %36, %30 : vector<24x1xf32>
    %c1 = arith.constant 1 : index
    %38 = memref.load %arg1[%c1] : memref<3xf32, #tpu.memory_space<smem>>
    %39 = vector.broadcast %38 : f32 to vector<24x1xf32>
    %40 = arith.mulf %39, %4 : vector<24x1xf32>
    %41 = arith.addf %37, %40 : vector<24x1xf32>
    %c2 = arith.constant 2 : index
    %42 = memref.load %arg1[%c2] : memref<3xf32, #tpu.memory_space<smem>>
    %43 = vector.broadcast %42 : f32 to vector<24x1xf32>
    %44 = arith.mulf %43, %34 : vector<24x1xf32>
    %45 = arith.addf %41, %44 : vector<24x1xf32>
    %46 = arith.negf %45 : vector<24x1xf32>
    %47 = math.exp %46 : vector<24x1xf32>
    %cst_10 = arith.constant 1.000000e+00 : f32
    %48 = vector.broadcast %cst_10 : f32 to vector<24x1xf32>
    %49 = arith.addf %48, %47 : vector<24x1xf32>
    %50 = arith.divf %48, %49 : vector<24x1xf32>
    %51 = vector.broadcast %50 : vector<24x1xf32> to vector<24x256xf32>
    %52 = arith.mulf %0, %51 : vector<24x256xf32>
    %c0_11 = arith.constant 0 : index
    %c0_12 = arith.constant 0 : index
    %53 = vector.load %arg3[%c0_11, %c0_12] : memref<24x256xf32, #tpu.memory_space<vmem>>, vector<24x256xf32>
    tpu.vector_store %arg3[%c0_11, %c0_12], %52 {strides = array<i32>} : memref<24x256xf32, #tpu.memory_space<vmem>>, vector<24x256xf32>,
    return
  }
  func.func @transform_0(%arg0: i32) -> i32 {
    %c0_i32 = arith.constant 0 : i32
    %c0_i32_0 = arith.constant 0 : i32
    return %c0_i32 : i32
  }
  func.func @transform_1(%arg0: i32) -> (i32, i32) {
    %c0_i32 = arith.constant 0 : i32
    %c0_i32_0 = arith.constant 0 : i32
    %c0_i32_1 = arith.constant 0 : i32
    return %c0_i32, %c0_i32_0 : i32, i32
  }
  func.func @transform_2(%arg0: i32) -> (i32, i32) {
    %c0_i32 = arith.constant 0 : i32
    %c0_i32_0 = arith.constant 0 : i32
    %c0_i32_1 = arith.constant 0 : i32
    return %c0_i32, %c0_i32_0 : i32, i32
  }
}

</mosaic_0001>

<llo_original>
// kernel: tpu_custom_call.1
$region0: #{tpu_custom_call.1}
  #allocation0 [shape = 'u32[]', space=smem, size = 0x4, offset = 0x4, fixed_abs, tag = 'smem constant byte address 0x4 - core index']
  #allocation1 [shape = 'u32[144,128]{1,0:T(1,128)}', space=vmem, size = 0x12000, scoped, tag = 'internal scratch']
  %s0 = inlined_call_operand.hbm [shape: f32[3], index: 0, kind: input, shape index: {}]
  %s1 = inlined_call_operand.hbm [shape: f32[24,256], index: 1, kind: input, shape index: {}]
  %s2 = inlined_call_operand.hbm [shape: f32[24,256], index: 2, kind: output, shape index: {}]
  %s3 = sld [smem:[#allocation0]]
  $region26: #{tpu_custom_call.1} parent=0
    _
  %s5 = ssub.s32 1, %s3
  %s6 = scalar_select 0, %s5, %s3
  $region1: #{tpu_custom_call.1} parent=0
    #allocation2 [shape = 'u8[512]{0}', space=smem, size = 0x200, scoped, tag = 'input window, operand 0, single buffered']
    #allocation3 [shape = 's32[1]{0}', space=sflag, size = 0x4, scoped, tag = 'scoped memory for tpu_custom_call.1']
    #allocation4 [shape = 's32[1]{0}', space=sflag, size = 0x4, scoped, tag = 'scoped memory for tpu_custom_call.1']
    #allocation5 [shape = 's32[1]{0}', space=sflag, size = 0x4, scoped, tag = 'scoped memory for tpu_custom_call.1']
    #allocation6 [shape = 'u8[24576]{0}', space=vmem, size = 0x6000, scoped, tag = 'input window, operand 1, single buffered']
    #allocation7 [shape = 'u8[24576]{0}', space=vmem, size = 0x6000, scoped, tag = 'output window, operand 0, single buffered']
    %7 = vsyncpa [#allocation5], 0
    %8 = vsyncpa [#allocation3], 0
    %9 = vsyncpa [#allocation4], 0
    // Predicated region
    $region2: #{tpu_custom_call.1} parent=1 // pred_check
      _
    $region3: #{tpu_custom_call.1} parent=1 // pred_check_branch
      %11 = sbr.rel (0) target = $region5
    $region4: #{tpu_custom_call.1} parent=1 // pred_region
      %s13 = ssub.s32 16, 16
      %14 = vsyncadd [#allocation5], %s13
      %17 = dma.hbm_to_smem %s0, 16, [#allocation2], [#allocation5]
    $region5: #{tpu_custom_call.1} parent=1 // pred_fallthru
      _
    // Predicated region
    $region6: #{tpu_custom_call.1} parent=1 // pred_check
      _
    $region7: #{tpu_custom_call.1} parent=1 // pred_check_branch
      %19 = sbr.rel (0) target = $region9
    $region8: #{tpu_custom_call.1} parent=1 // pred_region
      %s21 = ssub.s32 768, 768
      %22 = vsyncadd [#allocation3], %s21
      %s23 = sshll.u32 [#allocation6], 4
      %s24 = int_to_ptr.vmem [resolvable:$true] %s23
      %29 = dma.hbm_to_vmem [thread:$0]  %s1, 768, %s24, [#allocation3], 256, 256, 16
    $region9: #{tpu_custom_call.1} parent=1 // pred_fallthru
      _
    // Predicated region
    $region10: #{tpu_custom_call.1} parent=1 // pred_check
      _
    $region11: #{tpu_custom_call.1} parent=1 // pred_check_branch
      %31 = sbr.rel (0) target = $region13
    $region12: #{tpu_custom_call.1} parent=1 // pred_region
      %32 = dma.done [#allocation5], 16
    $region13: #{tpu_custom_call.1} parent=1 // pred_fallthru
      _
    // Predicated region
    $region14: #{tpu_custom_call.1} parent=1 // pred_check
      _
    $region15: #{tpu_custom_call.1} parent=1 // pred_check_branch
      %34 = sbr.rel (0) target = $region17
    $region16: #{tpu_custom_call.1} parent=1 // pred_region
      %35 = dma.done [#allocation3], 768
    $region17: #{tpu_custom_call.1} parent=1 // pred_fallthru
      _
    %36 = sfence
    %v37 = vld [vmem:[#allocation6] sm:$0xff]
    %v38 = vld [vmem:[#allocation6 + $0x8] sm:$0xff]
    %v39 = vld [vmem:[#allocation6 + $0x10] sm:$0xff]
    %v40 = vld [vmem:[#allocation6 + $0x18] sm:$0xff]
    %v41 = vld [vmem:[#allocation6 + $0x20] sm:$0xff]
    %v42 = vld [vmem:[#allocation6 + $0x28] sm:$0xff]
    %v43 = vadd.f32 %v37, %v38
    %44 = vadd.xlane.f32.xlu0 %v43
    %v45 = vpop.xlane.xlu0 %44
    %v46 = vadd.f32 %v39, %v40
    %47 = vadd.xlane.f32.xlu0 %v46
    %v48 = vpop.xlane.xlu0 %47
    %v49 = vadd.f32 %v41, %v42
    %50 = vadd.xlane.f32.xlu0 %v49
    %v51 = vpop.xlane.xlu0 %50
    %v52 = vrcp.pop 256.0
    %v53 = vmul.f32 %v45, %v52
    %v54 = vmul.f32 %v48, %v52
    %v55 = vmul.f32 %v51, %v52
    %vm59 = vcmask 1040384
    %v60 = vrot.slane %v53, 7
    %v61 = vrot.slane %v54, 7
    %v62 = vsel %vm59, %v60, %v61
    %v63 = vrot.slane %v55, 7
    %v64 = vsel %vm59, %v61, %v63
    %v68 = vsel %vm59, 0.0, %v60
    %vm69 = vcmask 1046528
    %v70 = vrot.slane %v53, 1
    %v71 = vrot.slane %v54, 1
    %v72 = vsel %vm69, %v70, %v71
    %v73 = vrot.slane %v55, 1
    %v74 = vsel %vm69, %v71, %v73
    %v78 = vsel %vm69, %v73, 0.0
    %v79 = vlaneseq
    %v80 = vshrl.u32 %v79, 7
    %v81 = vadd.s32 %v80, 8
    %v82 = vadd.s32 %v80, 16
    %vm83 = vcmp.lt.s32.totalorder %v80, 0
    %v84 = vsub.s32 0, %v80
    %v85 = vsel %vm83, %v84, %v80
    %v86 = vshrl.u32 %v85, 2
    %v87 = vand.u32 %v85, 3
    %v88 = vsub.s32 0, %v87
    %v89 = vsel %vm83, %v88, %v87
    %vm90 = vcmp.lt.s32.totalorder %v81, 0
    %v91 = vsub.s32 0, %v81
    %v92 = vsel %vm90, %v91, %v81
    %v93 = vshrl.u32 %v92, 2
    %v94 = vand.u32 %v92, 3
    %v95 = vsub.s32 0, %v94
    %v96 = vsel %vm90, %v95, %v94
    %vm97 = vcmp.lt.s32.totalorder %v82, 0
    %v98 = vsub.s32 0, %v82
    %v99 = vsel %vm97, %v98, %v82
    %v100 = vshrl.u32 %v99, 2
    %v101 = vand.u32 %v99, 3
    %v102 = vsub.s32 0, %v101
    %v103 = vsel %vm97, %v102, %v101
    %vm104 = vcmp.ne.s32.totalorder %v89, 0
    %vm105 = vcmp.ne.s32.totalorder %v96, 0
    %vm106 = vcmp.ne.s32.totalorder %v103, 0
    %vm107 = vcmp.lt.s32.totalorder %v89, 0
    %vm108 = vcmp.lt.s32.totalorder %v96, 0
    %vm109 = vcmp.lt.s32.totalorder %v103, 0
    %vm110 = vmand %vm107, %vm104
    %vm111 = vmand %vm108, %vm105
    %vm112 = vmand %vm109, %vm106
    %v113 = vadd.s32 %v89, 4
    %v114 = vadd.s32 %v96, 4
    %v115 = vadd.s32 %v103, 4
    %v116 = vsel %vm110, %v113, %v89
    %v117 = vsel %vm111, %v114, %v96
    %v118 = vsel %vm112, %v115, %v103
    %vm119 = vcmp.eq.s32.totalorder %v116, 0
    %vm120 = vcmp.eq.s32.totalorder %v117, 0
    %vm121 = vcmp.eq.s32.totalorder %v118, 0
    %v122 = vsel %vm119, 0.0, %v68
    %v123 = vsel %vm120, 0.0, %v62
    %v124 = vsel %vm121, 0.0, %v64
    %vm125 = vcmp.eq.s32.totalorder %v116, 3
    %vm126 = vcmp.eq.s32.totalorder %v117, 3
    %vm127 = vcmp.eq.s32.totalorder %v118, 3
    %v128 = vsel %vm125, 0.0, %v72
    %v129 = vsel %vm126, 0.0, %v74
    %v130 = vsel %vm127, 0.0, %v78
    %s131 = sld [smem:[#allocation2]]
    %v132 = vstv %s131
    %v133 = vmul.f32 %v132, %v122
    %v134 = vmul.f32 %v132, %v123
    %v135 = vmul.f32 %v132, %v124
    %s136 = sld [smem:[#allocation2 + $0x1]]
    %v137 = vstv %s136
    %v138 = vmul.f32 %v137, %v53
    %v139 = vmul.f32 %v137, %v54
    %v140 = vmul.f32 %v137, %v55
    %v141 = vadd.f32 %v133, %v138
    %v142 = vadd.f32 %v134, %v139
    %v143 = vadd.f32 %v135, %v140
    %s144 = sld [smem:[#allocation2 + $0x2]]
    %v145 = vstv %s144
    %v146 = vmul.f32 %v145, %v128
    %v147 = vmul.f32 %v145, %v129
    %v148 = vmul.f32 %v145, %v130
    %v149 = vadd.f32 %v141, %v146
    %v150 = vadd.f32 %v142, %v147
    %v151 = vadd.f32 %v143, %v148
    %v152 = vxor.u32 %v149, 2147483648
    %v153 = vxor.u32 %v150, 2147483648
    %v154 = vxor.u32 %v151, 2147483648
    %v155 = vmul.f32 %v152, 1.442695
    %v156 = vpow.pop %v155
    %v157 = vmul.f32 %v153, 1.442695
    %v158 = vpow.pop %v157
    %v159 = vmul.f32 %v154, 1.442695
    %v160 = vpow.pop %v159
    %v161 = vadd.f32 %v156, 1.0
    %v162 = vadd.f32 %v158, 1.0
    %v163 = vadd.f32 %v160, 1.0
    %v164 = vrcp.pop %v161
    %v165 = vmul.f32 1.0, %v164
    %v166 = vrcp.pop %v162
    %v167 = vmul.f32 1.0, %v166
    %v168 = vrcp.pop %v163
    %v169 = vmul.f32 1.0, %v168
    %171 = vset.pattern.permute.xlu0 0
    %172 = vperm.xlu0 %171, %v165
    %v173 = vpop.permute.xlu0 %172
    %176 = vset.pattern.permute.xlu0 0
    %177 = vperm.xlu0 %176, %v167
    %v178 = vpop.permute.xlu0 %177
    %181 = vset.pattern.permute.xlu0 0
    %182 = vperm.xlu0 %181, %v169
    %v183 = vpop.permute.xlu0 %182
    %v185 = vmul.f32 %v37, %v173
    %v186 = vmul.f32 %v38, %v173
    %v187 = vmul.f32 %v39, %v178
    %v188 = vmul.f32 %v40, %v178
    %v189 = vmul.f32 %v41, %v183
    %v190 = vmul.f32 %v42, %v183
    %191 = vst [vmem:[#allocation7] sm:$0xff] %v185
    %192 = vst [vmem:[#allocation7 + $0x8] sm:$0xff] %v186
    %193 = vst [vmem:[#allocation7 + $0x10] sm:$0xff] %v187
    %194 = vst [vmem:[#allocation7 + $0x18] sm:$0xff] %v188
    %195 = vst [vmem:[#allocation7 + $0x20] sm:$0xff] %v189
    %196 = vst [vmem:[#allocation7 + $0x28] sm:$0xff] %v190
    // Predicated region
    $region18: #{tpu_custom_call.1} parent=1 // pred_check
      _
    $region19: #{tpu_custom_call.1} parent=1 // pred_check_branch
      %198 = sbr.rel (0) target = $region21
    $region20: #{tpu_custom_call.1} parent=1 // pred_region
      %s200 = ssub.s32 768, 768
      %201 = vsyncadd [#allocation4], %s200
      %s202 = sshll.u32 [#allocation7], 4
      %s203 = int_to_ptr.vmem [resolvable:$true] %s202
      %208 = dma.vmem_to_hbm [thread:$0]  %s203, 768, %s2, [#allocation4], 256, 256, 16
    $region21: #{tpu_custom_call.1} parent=1 // pred_fallthru
      _
    // Predicated region
    $region22: #{tpu_custom_call.1} parent=1 // pred_check
      _
    $region23: #{tpu_custom_call.1} parent=1 // pred_check_branch
      %210 = sbr.rel (0) target = $region25
    $region24: #{tpu_custom_call.1} parent=1 // pred_region
      %211 = dma.done [#allocation4], 768
    $region25: #{tpu_custom_call.1} parent=1 // pred_fallthru
      _
    %212 = vsyncpa [#allocation3], 1
    %213 = vsyncpa [#allocation4], 1
    %214 = vsyncpa [#allocation5], 1

</llo_original>
